<compile_context>
chip_gen: v7x
topology: tpu7x:2x2x1
jax: 0.10.0
libtpu: 0.0.40
codegen_flags: <defaults>
</compile_context>

<pallas_src>
import functools

import jax
import jax.numpy as jnp
from jax.experimental import pallas as pl
from jax.experimental.pallas import tpu as pltpu

BN_EPS = 1e-5
_LANE = 128
_SUBLANE = 8


def _round_up(x, m):
    return (x + m - 1) // m * m


def _vmem_limit_bytes():
    """Per-chip VMEM budget: ~75% of capacity, capped at 100 MiB.
    (v5e/v6e: 128 MiB physical -> 96 MiB; v7x: 64 MiB -> 48 MiB.)"""
    try:
        cap = int(pltpu.get_tpu_info().vmem_capacity_bytes)
    except Exception:
        cap = 64 * 1024 * 1024  # conservative fallback (v7x-sized)
    return min(cap * 3 // 4, 100 * 1024 * 1024)


def _pick_tm(m, cin, cp, x_bytes, out_bytes, vmem_limit, tm_max):
    """Largest multiple-of-16 row tile whose double-buffered x/out tiles plus the
    (double-buffered) resident W^T fit comfortably in the per-chip VMEM budget."""
    budget = int(vmem_limit * 0.7)
    fixed = 2 * cin * cp * x_bytes + 8 * 16 * cp * 4          # W^T buffers + stats/affine slack
    per_row = 2 * cin * x_bytes + 2 * cp * max(out_bytes, 4)  # x tile + out tile, double-buffered
    tm = (budget - fixed) // max(per_row, 1)
    tm = min(tm, tm_max, _round_up(m, 16))
    tm = max(16, (tm // 16) * 16)                             # bf16 sublane packing wants 16
    return int(tm)


def _stats_kernel(x_ref, w_ref, stats_ref, *, tm, tiles_per_shard, m_total, need_mask):
    """Pass 1: accumulate per-channel sum / sum-of-squares of y = x @ W^T over row tiles.

    stats_ref is (16, Cp): rows 0:8 = per-sublane-slot partials of sum(y), rows 8:16 of
    sum(y*y).  The 8->1 cross-sublane reduction happens once in the wrapper."""
    @pl.when(pl.program_id(1) == 0)
    def _():
        stats_ref[...] = jnp.zeros_like(stats_ref)

    y = jnp.dot(x_ref[...], w_ref[...], preferred_element_type=jnp.float32)  # (TM, Cp) f32
    if need_mask:
        # Ragged last tile: rows >= M read out-of-bounds garbage -> select them to zero
        # (jnp.where is a select, so even NaN garbage contributes nothing).
        row = jax.lax.broadcasted_iota(jnp.int32, (tm, 1), 0)
        g0 = (pl.program_id(0) * tiles_per_shard + pl.program_id(1)) * tm
        y = jnp.where(g0 + row < m_total, y, 0.0)

    cp = y.shape[-1]
    y3 = y.reshape(tm // _SUBLANE, _SUBLANE, cp)           # layout no-op; sum(0) is pure VPU
    stats_ref[0:8, :] += jnp.sum(y3, axis=0)               # s1 partials, full-sublane store
    stats_ref[8:16, :] += jnp.sum(y3 * y3, axis=0)         # s2 partials


def _apply_kernel(x_ref, w_ref, affine_ref, o_ref):
    """Pass 2: recompute y per tile and apply the pre-folded BN affine + ReLU."""
    y = jnp.dot(x_ref[...], w_ref[...], preferred_element_type=jnp.float32)  # (TM, Cp) f32
    scale = affine_ref[0:1, :]
    shift = affine_ref[1:2, :]
    o_ref[...] = jnp.maximum(y * scale + shift, 0.0).astype(o_ref.dtype)


def linearblock_forward(x, weight, gamma, beta, *, compute_dtype=jnp.bfloat16, tm_max=1024):
    """x: (..., Cin) e.g. (B, N, Cin) or (B, N, S, Cin); weight: (Cout, Cin);
    gamma/beta: (Cout,).  Returns (..., Cout) in x.dtype."""
    orig_shape = x.shape
    cin = orig_shape[-1]
    cout = weight.shape[0]
    m = 1
    for d in orig_shape[:-1]:
        m *= d

    cp = _round_up(cout, _LANE)                 # lane-dense padded channel count
    out_dtype = x.dtype
    x_bytes = jnp.dtype(compute_dtype).itemsize
    out_bytes = jnp.dtype(out_dtype).itemsize
    vmem_limit = _vmem_limit_bytes()
    tm = _pick_tm(m, cin, cp, x_bytes, out_bytes, vmem_limit, tm_max)

    n_tiles = -(-m // tm)
    # Split the stats reduction into two shards (one per TensorCore on v7x; essentially free
    # on single-core chips) whenever the tile count divides evenly.
    shards = 2 if (n_tiles >= 2 and n_tiles % 2 == 0) else 1
    tiles_per_shard = n_tiles // shards
    need_mask = (m % tm) != 0

    # Inputs in compute_dtype (bf16 by default) -> half-width HBM stream and native MXU rate.
    # No row padding / extra copy of x: the ragged last tile is handled in-kernel.
    x2 = x.reshape(m, cin).astype(compute_dtype)
    wt = weight.T.astype(compute_dtype)
    if cp != cout:
        wt = jnp.pad(wt, ((0, 0), (0, cp - cout)))   # zero cols -> padded channels stay 0

    # ---- Pass 1: global BN statistics (per-shard partials, reduced below). ----
    stats_kernel = functools.partial(
        _stats_kernel, tm=tm, tiles_per_shard=tiles_per_shard, m_total=m, need_mask=need_mask)
    stats = pl.pallas_call(
        stats_kernel,
        out_shape=jax.ShapeDtypeStruct((shards * 16, cp), jnp.float32),
        grid_spec=pltpu.PrefetchScalarGridSpec(
            num_scalar_prefetch=0,
            grid=(shards, tiles_per_shard),
            in_specs=[
                pl.BlockSpec((tm, cin), lambda s, i: (s * tiles_per_shard + i, 0)),  # x tile
                pl.BlockSpec((cin, cp), lambda s, i: (0, 0)),                        # W^T resident
            ],
            out_specs=pl.BlockSpec((16, cp), lambda s, i: (s, 0)),   # per-shard accumulator
        ),
        compiler_params=pltpu.CompilerParams(
            dimension_semantics=("parallel", "arbitrary"),
            vmem_limit_bytes=vmem_limit,
        ),
    )(x2, wt)

    # ---- Fold BN once (hoisted out of the per-tile loop); tiny JAX ops on (16*shards, Cp). ----
    stats = stats.reshape(shards, 2, _SUBLANE, cp)
    s1 = jnp.sum(stats[:, 0], axis=(0, 1))              # (Cp,)
    s2 = jnp.sum(stats[:, 1], axis=(0, 1))              # (Cp,)
    inv_m = 1.0 / float(m)
    mean = s1 * inv_m
    # TODO(synk): E[y^2]-E[y]^2 can cancel for channels with |mean| >> std; a centered third
    #             pass (or Welford) would track PyTorch more tightly in that regime.
    var = jnp.maximum(s2 * inv_m - mean * mean, 0.0)     # biased (training-mode) variance
    gp = jnp.pad(gamma.astype(jnp.float32), (0, cp - cout))
    bp = jnp.pad(beta.astype(jnp.float32), (0, cp - cout))
    scale = gp * jax.lax.rsqrt(var + BN_EPS)
    shift = bp - mean * scale
    affine = jnp.stack([scale, shift], axis=0)           # (2, Cp) f32

    # ---- Pass 2: recompute matmul + folded affine + ReLU (independent tiles). ----
    out = pl.pallas_call(
        _apply_kernel,
        out_shape=jax.ShapeDtypeStruct((m, cp), out_dtype),
        grid_spec=pltpu.PrefetchScalarGridSpec(
            num_scalar_prefetch=0,
            grid=(n_tiles,),
            in_specs=[
                pl.BlockSpec((tm, cin), lambda i: (i, 0)),   # x tile
                pl.BlockSpec((cin, cp), lambda i: (0, 0)),   # W^T resident
                pl.BlockSpec((2, cp), lambda i: (0, 0)),     # folded scale/shift
            ],
            out_specs=pl.BlockSpec((tm, cp), lambda i: (i, 0)),
        ),
        compiler_params=pltpu.CompilerParams(
            dimension_semantics=("parallel",),
            vmem_limit_bytes=vmem_limit,
        ),
    )(x2, wt, affine)

    if cp != cout:
        out = out[:, :cout]
    return out.reshape(*orig_shape[:-1], cout)


def _reference(x, weight, gamma, beta):
    """Pure-JAX (f32) reference mirroring the PyTorch forward."""
    y = jnp.einsum("...i,oi->...o", x.astype(jnp.float32), weight.astype(jnp.float32))
    m_axes = tuple(range(y.ndim - 1))
    mean = jnp.mean(y, axis=m_axes, keepdims=True)
    var = jnp.mean((y - mean) ** 2, axis=m_axes, keepdims=True)
    y = (y - mean) / jnp.sqrt(var + BN_EPS)
    y = y * gamma + beta
    return jnp.maximum(y, 0.0).astype(x.dtype)


if __name__ == "__main__":
    key = jax.random.PRNGKey(0)

    def _make(lead_shape, cin, cout, k):
        kx, kw, kg, kb = jax.random.split(k, 4)
        x = jax.random.normal(kx, (*lead_shape, cin), dtype=jnp.float32)
        # nn.Linear-style init; bias=False because BatchNorm follows.
        weight = jax.random.uniform(kw, (cout, cin), dtype=jnp.float32,
                                    minval=-1.0 / (cin ** 0.5), maxval=1.0 / (cin ** 0.5))
        gamma = jnp.ones((cout,), jnp.float32) + 0.01 * jax.random.normal(kg, (cout,))
        beta = 0.01 * jax.random.normal(kb, (cout,), dtype=jnp.float32)
        return x, weight, gamma, beta

    k1, k2, k3 = jax.random.split(key, 3)

    # Case 1: (B, N, Cin) point features — default bf16 compute path and f32 path.
    x, w, g, b = _make((2, 64), 32, 64, k1)
    ref = _reference(x, w, g, b)
    out_bf16 = jax.block_until_ready(linearblock_forward(x, w, g, b))
    assert out_bf16.shape == (2, 64, 64)
    assert jnp.allclose(out_bf16, ref, atol=3e-2, rtol=3e-2), "bf16 path mismatch"
    out_f32 = jax.block_until_ready(
        linearblock_forward(x, w, g, b, compute_dtype=jnp.float32))
    assert jnp.allclose(out_f32, ref, atol=1e-4, rtol=1e-4), "f32 path mismatch"

    # Case 2: 4-D (B, N, S, Cin) input with a ragged row count -> in-kernel row masking,
    # partial last blocks, channel padding 48 -> 128.
    x, w, g, b = _make((2, 3, 7), 32, 48, k2)
    ref = _reference(x, w, g, b)
    out = jax.block_until_ready(
        linearblock_forward(x, w, g, b, compute_dtype=jnp.float32))
    assert out.shape == (2, 3, 7, 48)
    assert jnp.allclose(out, ref, atol=1e-4, rtol=1e-4), "ragged-tile mismatch"

    # Case 3: several row tiles -> 2-shard stats reduction (megacore split on v7x).
    x, w, g, b = _make((2, 128), 32, 64, k3)
    ref = _reference(x, w, g, b)
    out = jax.block_until_ready(
        linearblock_forward(x, w, g, b, compute_dtype=jnp.float32, tm_max=64))
    assert out.shape == (2, 128, 64)
    assert jnp.allclose(out, ref, atol=1e-4, rtol=1e-4), "sharded-stats mismatch"

    print("KERNEL_OK")
</pallas_src>

<mosaic_0001>
module attributes {stable_mosaic.version = 11 : i64} {
  func.func @_stats_kernel(%arg0: i32, %arg1: i32, %arg2: memref<128x32xbf16, #tpu.memory_space<vmem>>, %arg3: memref<32x128xbf16, #tpu.memory_space<vmem>>, %arg4: memref<16x128xf32, #tpu.memory_space<vmem>>) attributes {dimension_semantics = [#tpu.dimension_semantics<parallel>, #tpu.dimension_semantics<arbitrary>], iteration_bounds = array<i64: 1, 1>, scalar_prefetch = 0 : i64, scratch_operands = 0 : i64, tpu.core_type = #tpu.core_type<tc>, window_params = [{transform_indices = @transform_0, window_bounds = array<i64: 128, 32>}, {pipeline_mode = #tpu.pipeline_mode<synchronous>, transform_indices = @transform_1, window_bounds = array<i64: 32, 128>}, {transform_indices = @transform_2, window_bounds = array<i64: 16, 128>}]} {
    %c0_i32 = arith.constant 0 : i32
    %0 = arith.cmpi eq, %arg1, %c0_i32 : i32
    %1 = arith.extui %0 : i1 to i32
    %c0_i32_0 = arith.constant 0 : i32
    %2 = arith.cmpi ne, %1, %c0_i32_0 : i32
    scf.if %2 {
      %cst_13 = arith.constant 0.000000e+00 : f32
      %16 = vector.broadcast %cst_13 : f32 to vector<16x128xf32>
      %c0_14 = arith.constant 0 : index
      %c0_15 = arith.constant 0 : index
      %17 = vector.load %arg4[%c0_14, %c0_15] : memref<16x128xf32, #tpu.memory_space<vmem>>, vector<16x128xf32>
      tpu.vector_store %arg4[%c0_14, %c0_15], %16 {strides = array<i32>} : memref<16x128xf32, #tpu.memory_space<vmem>>, vector<16x128xf32>,
    } else {
    }
    %c0 = arith.constant 0 : index
    %c0_1 = arith.constant 0 : index
    %3 = vector.load %arg2[%c0, %c0_1] : memref<128x32xbf16, #tpu.memory_space<vmem>>, vector<128x32xbf16>
    %c0_2 = arith.constant 0 : index
    %c0_3 = arith.constant 0 : index
    %4 = vector.load %arg3[%c0_2, %c0_3] : memref<32x128xbf16, #tpu.memory_space<vmem>>, vector<32x128xbf16>
    %cst = arith.constant dense<0.000000e+00> : vector<128x128xf32>
    %5 = tpu.matmul %3, %4, %cst {dimension_numbers = #tpu.dot_dimension_numbers<[1], [0], [0], [1], [0, 0, 1, 1], [], []>} : vector<128x32xbf16>, vector<32x128xbf16>, vector<128x128xf32> -> vector<128x128xf32>
    %6 = vector.shape_cast %5 : vector<128x128xf32> to vector<16x8x128xf32>
    %c0_4 = arith.constant 0 : index
    %c0_5 = arith.constant 0 : index
    %7 = vector.load %arg4[%c0_4, %c0_5] : memref<16x128xf32, #tpu.memory_space<vmem>>, vector<8x128xf32>
    %cst_6 = arith.constant dense<0.000000e+00> : vector<8x128xf32>
    %8 = vector.multi_reduction <add>, %6, %cst_6 [0] : vector<16x8x128xf32> to vector<8x128xf32>
    %9 = arith.addf %7, %8 : vector<8x128xf32>
    %c0_7 = arith.constant 0 : index
    %c0_8 = arith.constant 0 : index
    %10 = vector.load %arg4[%c0_7, %c0_8] : memref<16x128xf32, #tpu.memory_space<vmem>>, vector<8x128xf32>
    tpu.vector_store %arg4[%c0_7, %c0_8], %9 {strides = array<i32>} : memref<16x128xf32, #tpu.memory_space<vmem>>, vector<8x128xf32>,
    %c8 = arith.constant 8 : index
    %c0_9 = arith.constant 0 : index
    %11 = vector.load %arg4[%c8, %c0_9] : memref<16x128xf32, #tpu.memory_space<vmem>>, vector<8x128xf32>
    %12 = arith.mulf %6, %6 : vector<16x8x128xf32>
    %cst_10 = arith.constant dense<0.000000e+00> : vector<8x128xf32>
    %13 = vector.multi_reduction <add>, %12, %cst_10 [0] : vector<16x8x128xf32> to vector<8x128xf32>
    %14 = arith.addf %11, %13 : vector<8x128xf32>
    %c8_11 = arith.constant 8 : index
    %c0_12 = arith.constant 0 : index
    %15 = vector.load %arg4[%c8_11, %c0_12] : memref<16x128xf32, #tpu.memory_space<vmem>>, vector<8x128xf32>
    tpu.vector_store %arg4[%c8_11, %c0_12], %14 {strides = array<i32>} : memref<16x128xf32, #tpu.memory_space<vmem>>, vector<8x128xf32>,
    return
  }
  func.func @transform_0(%arg0: i32, %arg1: i32) -> (i32, i32) {
    %c1_i32 = arith.constant 1 : i32
    %0 = arith.muli %arg0, %c1_i32 : i32
    %1 = arith.addi %0, %arg1 : i32
    %c0_i32 = arith.constant 0 : i32
    %c0_i32_0 = arith.constant 0 : i32
    return %1, %c0_i32 : i32, i32
  }
  func.func @transform_1(%arg0: i32, %arg1: i32) -> (i32, i32) {
    %c0_i32 = arith.constant 0 : i32
    %c0_i32_0 = arith.constant 0 : i32
    %c0_i32_1 = arith.constant 0 : i32
    return %c0_i32, %c0_i32_0 : i32, i32
  }
  func.func @transform_2(%arg0: i32, %arg1: i32) -> (i32, i32) {
    %c0_i32 = arith.constant 0 : i32
    %c0_i32_0 = arith.constant 0 : i32
    return %arg0, %c0_i32 : i32, i32
  }
}

</mosaic_0001>

<llo_original>
// kernel: tpu_custom_call.1
$region0: #{tpu_custom_call.1}
  #allocation0 [shape = 'u32[]', space=smem, size = 0x4, offset = 0x4, fixed_abs, tag = 'smem constant byte address 0x4 - core index']
  #allocation1 [shape = 'u32[144,128]{1,0:T(1,128)}', space=vmem, size = 0x12000, scoped, tag = 'internal scratch']
  %s0 = inlined_call_operand.vmem [shape: bf16[128,32], index: 0, kind: input, shape index: {}]
  %s1 = inlined_call_operand.vmem [shape: bf16[32,128], index: 1, kind: input, shape index: {}]
  %s2 = inlined_call_operand.hbm [shape: f32[16,128], index: 2, kind: output, shape index: {}]
  %s3 = sld [smem:[#allocation0]]
  $region22: #{tpu_custom_call.1} parent=0
    _
  %s5 = ssub.s32 1, %s3
  %s6 = scalar_select 0, %s5, %s3
  $region1: #{tpu_custom_call.1} parent=0
    #allocation2 [shape = 'u8[8192]{0}', space=vmem, size = 0x2000, scoped, tag = 'output window, operand 0, single buffered']
    #allocation3 [shape = 's32[1]{0}', space=sflag, size = 0x4, scoped, tag = 'scoped memory for tpu_custom_call.1']
    %7 = vsyncpa [#allocation3], 0
    // Predicated region
    $region2: #{tpu_custom_call.1} parent=1 // pred_check
      _
    $region3: #{tpu_custom_call.1} parent=1 // pred_check_branch
      %9 = sbr.rel (0) target = $region5
    $region4: #{tpu_custom_call.1} parent=1 // pred_region
      %s10 = sadd.s32 0, 0
      %s11 = smul.u32 16, %s10
      %p12 = scmp.lt.s32.totalorder %s11, 15
      %s13 = scalar_select %p12, %s11, 15
      %s14 = smul.addr %s13, 4
      %s15 = scalar_lea.vmem %s0, %s14
      %s16 = sadd.s32 0, 0
      %s17 = smul.u32 16, %s16
    $region5: #{tpu_custom_call.1} parent=1 // pred_fallthru
      _
    // Predicated region
    $region6: #{tpu_custom_call.1} parent=1 // pred_check
      _
    $region7: #{tpu_custom_call.1} parent=1 // pred_check_branch
      %19 = sbr.rel (0) target = $region9
    $region8: #{tpu_custom_call.1} parent=1 // pred_region
      _
    $region9: #{tpu_custom_call.1} parent=1 // pred_fallthru
      _
    %s20 = sadd.s32 0, 0
    %s21 = smul.u32 16, %s20
    %p22 = scmp.lt.s32.totalorder %s21, 15
    %s23 = scalar_select %p22, %s21, 15
    %s24 = smul.addr %s23, 4
    %s25 = scalar_lea.vmem %s0, %s24
    %s26 = sadd.s32 0, 0
    %s27 = smul.u32 16, %s26
    %p28 = scmp.lt.s32.totalorder %s27, 15
    %s29 = scalar_select %p28, %s27, 15
    %s30 = smul.addr %s29, 4
    %s31 = scalar_lea.vmem %s0, %s30
    %s32 = sadd.s32 0, 0
    %s33 = smul.u32 16, %s32
    %p35 = scmp.eq.s32.totalorder 0, 0
    // Predicated region
    $region10: #{tpu_custom_call.1} parent=1 // pred_check
      %p36 = pneg %p35
    $region11: #{tpu_custom_call.1} parent=1 // pred_check_branch
      %38 = sbr.rel (%p36) target = $region13
    $region12: #{tpu_custom_call.1} parent=1 // pred_region
      %39 = vst [vmem:[#allocation2] sm:$0xff] 0.0
      %40 = vst [vmem:[#allocation2 + $0x8] sm:$0xff] 0.0
    $region13: #{tpu_custom_call.1} parent=1 // pred_fallthru
      _
    %v41 = vld [vmem:[%s31] sm:$0xf]
    %v42 = vld [vmem:[%s31 + $0x4] sm:$0xf]
    %v43 = vld [vmem:[%s31 + $0x8] sm:$0xf]
    %v44 = vld [vmem:[%s31 + $0xc] sm:$0xf]
    %v45 = vld [vmem:[%s31 + $0x10] sm:$0xf]
    %v46 = vld [vmem:[%s31 + $0x14] sm:$0xf]
    %v47 = vld [vmem:[%s31 + $0x18] sm:$0xf]
    %v48 = vld [vmem:[%s31 + $0x1c] sm:$0xf]
    %v49 = vld [vmem:[%s31 + $0x20] sm:$0xf]
    %v50 = vld [vmem:[%s31 + $0x24] sm:$0xf]
    %v51 = vld [vmem:[%s31 + $0x28] sm:$0xf]
    %v52 = vld [vmem:[%s31 + $0x2c] sm:$0xf]
    %v53 = vld [vmem:[%s31 + $0x30] sm:$0xf]
    %v54 = vld [vmem:[%s31 + $0x34] sm:$0xf]
    %v55 = vld [vmem:[%s31 + $0x38] sm:$0xf]
    %v56 = vld [vmem:[%s31 + $0x3c] sm:$0xf]
    %v57 = vld [vmem:[%s1] sm:$0xf]
    %v58 = vld [vmem:[%s1 + $0x4] sm:$0xf]
    %v59 = vld [vmem:[%s1 + $0x8] sm:$0xf]
    %v60 = vld [vmem:[%s1 + $0xc] sm:$0xf]
    %v77 = vunpack.c.l.b16 %v41
    %v78 = vunpack.c.l.b16 %v42
    %v79 = vunpack.c.l.b16 %v43
    %v80 = vunpack.c.l.b16 %v44
    %v81 = vunpack.c.l.b16 %v45
    %v82 = vunpack.c.l.b16 %v46
    %v83 = vunpack.c.l.b16 %v47
    %v84 = vunpack.c.l.b16 %v48
    %v85 = vunpack.c.l.b16 %v49
    %v86 = vunpack.c.l.b16 %v50
    %v87 = vunpack.c.l.b16 %v51
    %v88 = vunpack.c.l.b16 %v52
    %v89 = vunpack.c.l.b16 %v53
    %v90 = vunpack.c.l.b16 %v54
    %v91 = vunpack.c.l.b16 %v55
    %v92 = vunpack.c.l.b16 %v56
    %v93 = vpack.c.b16 %v78, %v77
    %v94 = vpack.c.b16 %v80, %v79
    %v95 = vpack.c.b16 %v82, %v81
    %v96 = vpack.c.b16 %v84, %v83
    %v97 = vpack.c.b16 %v86, %v85
    %v98 = vpack.c.b16 %v88, %v87
    %v99 = vpack.c.b16 %v90, %v89
    %v100 = vpack.c.b16 %v92, %v91
    %v105 = vunpack.c.l.b16 %v57
    %v106 = vunpack.c.l.b16 %v58
    %v107 = vunpack.c.l.b16 %v59
    %v108 = vunpack.c.l.b16 %v60
    %v109 = vpack.c.b16 %v106, %v105
    %v110 = vpack.c.b16 %v108, %v107
    %vm113 = vcmask 261120
    %v115 = vsel %vm113, %v93, 0
    %v118 = vsel %vm113, %v94, 0
    %v121 = vsel %vm113, %v95, 0
    %v124 = vsel %vm113, %v96, 0
    %v127 = vsel %vm113, %v97, 0
    %v130 = vsel %vm113, %v98, 0
    %v133 = vsel %vm113, %v99, 0
    %v136 = vsel %vm113, %v100, 0
    %138 = vmatprep.subr.bf16.mxu0 0
    %139 = vmatpush1.bf16.msra.mxu0 %v109
    %140 = vmatprep.subr.bf16.mxu0 0
    %141 = vmatpush1.bf16.msra.mxu0 %v110
    %142 = vmatprep.subr.bf16.mxu0 0
    %143 = vmatpush1.bf16.msra.mxu0 0
    %144 = vmatprep.subr.bf16.mxu0 0
    %145 = vmatpush1.bf16.msra.mxu0 0
    %146 = vmatprep.subr.bf16.mxu0 0
    %147 = vmatpush1.bf16.msra.mxu0 0
    %148 = vmatprep.subr.bf16.mxu0 0
    %149 = vmatpush1.bf16.msra.mxu0 0
    %150 = vmatprep.subr.bf16.mxu0 0
    %151 = vmatpush1.bf16.msra.mxu0 0
    %152 = vmatprep.subr.bf16.mxu0 0
    %153 = vmatpush1.bf16.msra.mxu0 0
    %154 = vmatprep.subr.bf16.mxu0 0
    %155 = vmatpush1.bf16.msra.mxu0 0
    %156 = vmatprep.subr.bf16.mxu0 0
    %157 = vmatpush1.bf16.msra.mxu0 0
    %158 = vmatprep.subr.bf16.mxu0 0
    %159 = vmatpush1.bf16.msra.mxu0 0
    %160 = vmatprep.subr.bf16.mxu0 0
    %161 = vmatpush1.bf16.msra.mxu0 0
    %162 = vmatprep.subr.bf16.mxu0 0
    %163 = vmatpush1.bf16.msra.mxu0 0
    %164 = vmatprep.subr.bf16.mxu0 0
    %165 = vmatpush1.bf16.msra.mxu0 0
    %166 = vmatprep.subr.bf16.mxu0 0
    %167 = vmatpush1.bf16.msra.mxu0 0
    %168 = vmatprep.subr.bf16.mxu0 0
    %169 = vmatpush1.bf16.msra.mxu0 0
    %170 = vmatprep.mubr.bf16.mxu0 0
    %171 = vmatmul.mubr.bf16.gmra.mrb[0].mxu0 %v115
    %v172 = vpop.f32.mrb[0].mxu0
    %v173 = vadd.f32 0.0, %v172
    %v174 = vpop.f32.mrb[0].mxu0
    %v175 = vpop.f32.mrb[0].mxu0
    %v176 = vadd.f32 0.0, %v175
    %v177 = vpop.f32.mrb[0].mxu0
    %178 = vmatprep.mubr.bf16.mxu0 0
    %179 = vmatmul.mubr.bf16.gmra.mrb[0].mxu0 %v118
    %v180 = vpop.f32.mrb[0].mxu0
    %v181 = vadd.f32 0.0, %v180
    %v182 = vpop.f32.mrb[0].mxu0
    %v183 = vpop.f32.mrb[0].mxu0
    %v184 = vadd.f32 0.0, %v183
    %v185 = vpop.f32.mrb[0].mxu0
    %186 = vmatprep.mubr.bf16.mxu0 0
    %187 = vmatmul.mubr.bf16.gmra.mrb[0].mxu0 %v121
    %v188 = vpop.f32.mrb[0].mxu0
    %v189 = vadd.f32 0.0, %v188
    %v190 = vpop.f32.mrb[0].mxu0
    %v191 = vpop.f32.mrb[0].mxu0
    %v192 = vadd.f32 0.0, %v191
    %v193 = vpop.f32.mrb[0].mxu0
    %194 = vmatprep.mubr.bf16.mxu0 0
    %195 = vmatmul.mubr.bf16.gmra.mrb[0].mxu0 %v124
    %v196 = vpop.f32.mrb[0].mxu0
    %v197 = vadd.f32 0.0, %v196
    %v198 = vpop.f32.mrb[0].mxu0
    %v199 = vpop.f32.mrb[0].mxu0
    %v200 = vadd.f32 0.0, %v199
    %v201 = vpop.f32.mrb[0].mxu0
    %202 = vmatprep.mubr.bf16.mxu0 0
    %203 = vmatmul.mubr.bf16.gmra.mrb[0].mxu0 %v127
    %v204 = vpop.f32.mrb[0].mxu0
    %v205 = vadd.f32 0.0, %v204
    %v206 = vpop.f32.mrb[0].mxu0
    %v207 = vpop.f32.mrb[0].mxu0
    %v208 = vadd.f32 0.0, %v207
    %v209 = vpop.f32.mrb[0].mxu0
    %210 = vmatprep.mubr.bf16.mxu0 0
    %211 = vmatmul.mubr.bf16.gmra.mrb[0].mxu0 %v130
    %v212 = vpop.f32.mrb[0].mxu0
    %v213 = vadd.f32 0.0, %v212
    %v214 = vpop.f32.mrb[0].mxu0
    %v215 = vpop.f32.mrb[0].mxu0
    %v216 = vadd.f32 0.0, %v215
    %v217 = vpop.f32.mrb[0].mxu0
    %218 = vmatprep.mubr.bf16.mxu0 0
    %219 = vmatmul.mubr.bf16.gmra.mrb[0].mxu0 %v133
    %v220 = vpop.f32.mrb[0].mxu0
    %v221 = vadd.f32 0.0, %v220
    %v222 = vpop.f32.mrb[0].mxu0
    %v223 = vpop.f32.mrb[0].mxu0
    %v224 = vadd.f32 0.0, %v223
    %v225 = vpop.f32.mrb[0].mxu0
    %226 = vmatprep.mubr.bf16.mxu0 0
    %227 = vmatmul.mubr.bf16.gmra.mrb[0].mxu0 %v136
    %v228 = vpop.f32.mrb[0].mxu0
    %v229 = vadd.f32 0.0, %v228
    %v230 = vpop.f32.mrb[0].mxu0
    %v231 = vpop.f32.mrb[0].mxu0
    %v232 = vadd.f32 0.0, %v231
    %v233 = vpop.f32.mrb[0].mxu0
    %234 = vdwg.mxu0
    %v235 = vld [vmem:[#allocation2] sm:$0xff]
    %v236 = vadd.f32 %v173, %v176
    %v237 = vadd.f32 %v236, %v181
    %v238 = vadd.f32 %v237, %v184
    %v239 = vadd.f32 %v238, %v189
    %v240 = vadd.f32 %v239, %v192
    %v241 = vadd.f32 %v240, %v197
    %v242 = vadd.f32 %v241, %v200
    %v243 = vadd.f32 %v242, %v205
    %v244 = vadd.f32 %v243, %v208
    %v245 = vadd.f32 %v244, %v213
    %v246 = vadd.f32 %v245, %v216
    %v247 = vadd.f32 %v246, %v221
    %v248 = vadd.f32 %v247, %v224
    %v249 = vadd.f32 %v248, %v229
    %v250 = vadd.f32 %v249, %v232
    %v251 = vadd.f32 %v235, %v250
    %252 = vst [vmem:[#allocation2] sm:$0xff] %v251
    %v253 = vld [vmem:[#allocation2 + $0x8] sm:$0xff]
    %v254 = vmul.f32 %v173, %v173
    %v255 = vmul.f32 %v176, %v176
    %v256 = vmul.f32 %v181, %v181
    %v257 = vmul.f32 %v184, %v184
    %v258 = vmul.f32 %v189, %v189
    %v259 = vmul.f32 %v192, %v192
    %v260 = vmul.f32 %v197, %v197
    %v261 = vmul.f32 %v200, %v200
    %v262 = vmul.f32 %v205, %v205
    %v263 = vmul.f32 %v208, %v208
    %v264 = vmul.f32 %v213, %v213
    %v265 = vmul.f32 %v216, %v216
    %v266 = vmul.f32 %v221, %v221
    %v267 = vmul.f32 %v224, %v224
    %v268 = vmul.f32 %v229, %v229
    %v269 = vmul.f32 %v232, %v232
    %v270 = vadd.f32 %v254, %v255
    %v271 = vadd.f32 %v270, %v256
    %v272 = vadd.f32 %v271, %v257
    %v273 = vadd.f32 %v272, %v258
    %v274 = vadd.f32 %v273, %v259
    %v275 = vadd.f32 %v274, %v260
    %v276 = vadd.f32 %v275, %v261
    %v277 = vadd.f32 %v276, %v262
    %v278 = vadd.f32 %v277, %v263
    %v279 = vadd.f32 %v278, %v264
    %v280 = vadd.f32 %v279, %v265
    %v281 = vadd.f32 %v280, %v266
    %v282 = vadd.f32 %v281, %v267
    %v283 = vadd.f32 %v282, %v268
    %v284 = vadd.f32 %v283, %v269
    %v285 = vadd.f32 %v253, %v284
    %286 = vst [vmem:[#allocation2 + $0x8] sm:$0xff] %v285
    // Predicated region
    $region14: #{tpu_custom_call.1} parent=1 // pred_check
      _
    $region15: #{tpu_custom_call.1} parent=1 // pred_check_branch
      %288 = sbr.rel (0) target = $region17
    $region16: #{tpu_custom_call.1} parent=1 // pred_region
      %s290 = ssub.s32 256, 256
      %291 = vsyncadd [#allocation3], %s290
      %s292 = sshll.u32 [#allocation2], 4
      %s293 = int_to_ptr.vmem [resolvable:$true] %s292
      %298 = dma.vmem_to_hbm [thread:$0]  %s293, 256, %s2, [#allocation3], 128, 128, 8
    $region17: #{tpu_custom_call.1} parent=1 // pred_fallthru
      _
    // Predicated region
    $region18: #{tpu_custom_call.1} parent=1 // pred_check
      _
    $region19: #{tpu_custom_call.1} parent=1 // pred_check_branch
      %300 = sbr.rel (0) target = $region21
    $region20: #{tpu_custom_call.1} parent=1 // pred_region
      %301 = dma.done [#allocation3], 256
    $region21: #{tpu_custom_call.1} parent=1 // pred_fallthru
      _
    %302 = vsyncpa [#allocation3], 1

</llo_original>
